<compile_context>
chip_gen: v5e
topology: v5e:2x2
jax: 0.10.0
libtpu: 0.0.40
codegen_flags: <defaults>
</compile_context>

<pallas_src>
import jax
import jax.numpy as jnp
from jax.experimental import pallas as pl
from jax.experimental.pallas import tpu as pltpu


_SUBLANE_UNIT = {1: 32, 2: 16, 4: 8}   # dtype itemsize -> sublane packing unit
_LANE = 128
_MAX_TH_ROWS = 128                     # bound for the fully-unrolled row-copy loop


def _round_up(x, m):
    return ((x + m - 1) // m) * m


def _get_vmem_capacity_bytes():
    """Generation-aware VMEM size (128 MiB on v5e/v6e, 64 MiB/core on v7x)."""
    try:
        info = pltpu.get_tpu_info()
        cap = getattr(info, "vmem_capacity_bytes", None)
        if cap:
            return int(cap)
    except Exception:
        pass
    return 64 * 1024 * 1024            # conservative default (v7x-sized)


def _per_block_cap_and_limit(vmem_capacity):
    """(per-direction block byte cap, vmem_limit ceiling) per generation."""
    if vmem_capacity >= 100 * 1024 * 1024:          # v5e / v6e: 128 MiB VMEM
        return 16 * 1024 * 1024, 96 * 1024 * 1024
    return 6 * 1024 * 1024, 48 * 1024 * 1024        # v7x: 64 MiB per TensorCore


def _tile_options(dim, unit):
    """Legal block sizes for a second-minor dim: the full dim, or a divisor of
    it that is a multiple of the dtype sublane unit (the (8,128) rule)."""
    opts = {dim}
    t = unit
    while t < dim:
        if dim % t == 0:
            opts.add(t)
        t += unit
    return sorted(opts)


def _lane_tile_options(dim):
    """Legal block sizes for the last (lane) dim: multiples of 128 dividing it,
    plus the full dim (callers guarantee dim % 128 == 0)."""
    opts = {dim}
    t = _LANE
    while t < dim:
        if dim % t == 0:
            opts.add(t)
        t += _LANE
    return sorted(opts)


def _padded_block_bytes(tc, th, tw, unit, itemsize):
    """Padded VMEM footprint of the input (tc, th, tw) and output (th, tc, tw)
    blocks: second-minor dim pads to the sublane unit, lane dim to 128."""
    tw_p = _round_up(tw, _LANE)
    pin = tc * _round_up(th, unit) * tw_p * itemsize
    pout = th * _round_up(tc, unit) * tw_p * itemsize
    return pin, pout


def _choose_tiles(C, H, W, itemsize, per_block_cap):
    """Pick (TC, TH, TW).  Returns None if no legal tile fits the cap."""
    unit = _SUBLANE_UNIT.get(itemsize, 8)
    best = None
    for tw in _lane_tile_options(W):
        for tc in _tile_options(C, unit):
            for th in _tile_options(H, unit):
                if th > _MAX_TH_ROWS:              # keep the row loop small
                    continue
                pin, pout = _padded_block_bytes(tc, th, tw, unit, itemsize)
                if max(pin, pout) > per_block_cap:  # never return over-cap tiles
                    continue
                # Prefer: full-W lane bursts, then TC == C (contiguous output
                # writeback per row), then the biggest tile, then the longest TH.
                key = (tw, tc == C, tc * th * tw, th)
                if best is None or key > best[0]:
                    best = (key, (tc, th, tw))
    return None if best is None else best[1]


def _ensure_min_blocks(B, C, H, W, tc, th, tw, unit, min_blocks):
    """Split TH (then TC) so the parallel grid has at least `min_blocks` blocks
    (keeps both v7x TensorCores busy).  Splits stay legal and under the cap."""
    def blocks(tc_, th_, tw_):
        return B * (C // tc_) * (H // th_) * (W // tw_)

    if blocks(tc, th, tw) >= min_blocks:
        return tc, th, tw
    for cand in sorted(_tile_options(H, unit), reverse=True):
        if cand < th and blocks(tc, cand, tw) >= min_blocks:
            return tc, cand, tw
    for cand in sorted(_tile_options(C, unit), reverse=True):
        if cand < tc and blocks(cand, th, tw) >= min_blocks:
            return cand, th, tw
    return tc, th, tw


def _swap12_kernel(x_ref, o_ref):
    # x_ref block: (TC, TH, TW)  ->  o_ref block: (TH, TC, TW).
    # The coarse (c, h) block swap is already done by the BlockSpec index_maps.
    # Row loop: every *store* is a dense, lane/sublane-contiguous (TC, TW) slab
    # (the store slot is the scarcest VLIW resource); the strided access lands
    # on the load side where 3 vld slots are available.  `h` is a compile-time
    # constant (TH <= _MAX_TH_ROWS), so indexing is fully static.
    th = x_ref.shape[1]
    for h in range(th):
        o_ref[h, :, :] = x_ref[:, h, :]


def _pallas_swap12_4d(x):
    B, C, H, W = x.shape
    itemsize = jnp.dtype(x.dtype).itemsize
    unit = _SUBLANE_UNIT.get(itemsize, 8)

    vmem_capacity = _get_vmem_capacity_bytes()
    per_block_cap, limit_cap = _per_block_cap_and_limit(vmem_capacity)

    tiles = _choose_tiles(C, H, W, itemsize, per_block_cap)
    if tiles is None:
        return None                      # no legal tile -> caller falls back
    tc, th, tw = tiles

    # v7x has 2 TensorCores per chip; heuristically gate on the 64 MiB parts.
    min_blocks = 4 if vmem_capacity < 100 * 1024 * 1024 else 1
    tc, th, tw = _ensure_min_blocks(B, C, H, W, tc, th, tw, unit, min_blocks)

    pin, pout = _padded_block_bytes(tc, th, tw, unit, itemsize)
    vmem_need = 2 * (pin + pout) + (4 << 20)        # double-buffered in+out
    vmem_limit = int(min(limit_cap, max(32 * 1024 * 1024, vmem_need)))

    grid = (B, C // tc, H // th, W // tw)

    # TODO(synk): optionally sweep pipeline_mode=pl.Buffered(3) on the input
    # spec on 128 MiB parts when headroom allows (few-percent item).
    return pl.pallas_call(
        _swap12_kernel,
        out_shape=jax.ShapeDtypeStruct((B, H, C, W), x.dtype),
        grid_spec=pltpu.PrefetchScalarGridSpec(
            num_scalar_prefetch=0,
            grid=grid,
            in_specs=[
                pl.BlockSpec((pl.Squeezed(), tc, th, tw),
                             lambda b, c, h, w: (b, c, h, w)),
            ],
            # The dim-1 <-> dim-2 swap lives here: input block (c, h) is written
            # to output block (h, c); the coarse permutation is DMA addressing.
            out_specs=pl.BlockSpec((pl.Squeezed(), th, tc, tw),
                                   lambda b, c, h, w: (b, h, c, w)),
        ),
        compiler_params=pltpu.CompilerParams(
            dimension_semantics=("parallel", "parallel", "parallel", "parallel"),
            vmem_limit_bytes=vmem_limit,
        ),
        cost_estimate=pl.CostEstimate(
            flops=0, transcendentals=0, bytes_accessed=2 * x.size * itemsize
        ),
    )(x)


def pallas_transpose(x, dim0, dim1, *, min_pallas_bytes=0):
    """Equivalent of torch.Tensor.transpose(dim0, dim1).

    Pallas fast path: 4D (B, C, H, W) swap of dims 1 and 2 with a lane-dense
    last dim (W % 128 == 0).  Everything else falls back to XLA's transpose.
    """
    ndim = x.ndim
    dim0 = dim0 % ndim
    dim1 = dim1 % ndim
    if dim0 == dim1:
        return x
    lo, hi = sorted((dim0, dim1))

    itemsize = jnp.dtype(x.dtype).itemsize
    total_bytes = x.size * itemsize
    if (
        ndim == 4
        and (lo, hi) == (1, 2)
        and x.shape[3] >= _LANE
        and x.shape[3] % _LANE == 0      # lane-dense output only (else vst.msk)
        and total_bytes >= min_pallas_bytes
    ):
        out = _pallas_swap12_4d(x)
        if out is not None:
            return out

    # TODO(synk): batch-axis / lane-axis swaps need a dedicated 128x128 XLU
    # lane-transpose kernel; those and non-lane-dense shapes use XLA.
    return jnp.swapaxes(x, dim0, dim1)


if __name__ == "__main__":
    key = jax.random.PRNGKey(0)
    # NCHW with a lane-dense W so the Pallas fast path is exercised.
    B, C, H, W = 2, 4, 16, 128
    x = jax.random.normal(key, (B, C, H, W), dtype=jnp.float32)

    # Transpose(dim0=1, dim1=2): (B, C, H, W) -> (B, H, C, W)
    dim0, dim1 = 1, 2
    out = pallas_transpose(x, dim0, dim1)
    out = jax.block_until_ready(out)

    # Reference check (plain JAX, equivalent to torch .transpose(1, 2)).
    ref = jnp.swapaxes(x, dim0, dim1)
    assert out.shape == ref.shape, (out.shape, ref.shape)
    assert out.dtype == ref.dtype
    assert bool(jnp.all(out == ref))

    print("KERNEL_OK")
</pallas_src>

<mosaic_0001>
module attributes {stable_mosaic.version = 11 : i64} {
  func.func @_swap12_kernel(%arg0: i32, %arg1: i32, %arg2: i32, %arg3: i32, %arg4: memref<1x4x8x128xf32, #tpu.memory_space<vmem>>, %arg5: memref<1x8x4x128xf32, #tpu.memory_space<vmem>>) attributes {dimension_semantics = [#tpu.dimension_semantics<parallel>, #tpu.dimension_semantics<parallel>, #tpu.dimension_semantics<parallel>, #tpu.dimension_semantics<parallel>], iteration_bounds = array<i64: 2, 1, 2, 1>, scalar_prefetch = 0 : i64, scratch_operands = 0 : i64, tpu.core_type = #tpu.core_type<tc>, window_params = [{transform_indices = @transform_0, window_bounds = array<i64: 1, 4, 8, 128>}, {transform_indices = @transform_1, window_bounds = array<i64: 1, 8, 4, 128>}]} {
    %c0 = arith.constant 0 : index
    %c0_0 = arith.constant 0 : index
    %c0_1 = arith.constant 0 : index
    %c0_2 = arith.constant 0 : index
    %0 = vector.load %arg4[%c0, %c0_0, %c0_1, %c0_2] : memref<1x4x8x128xf32, #tpu.memory_space<vmem>>, vector<1x4x1x128xf32>
    %1 = vector.shape_cast %0 : vector<1x4x1x128xf32> to vector<4x128xf32>
    %c0_3 = arith.constant 0 : index
    %c0_4 = arith.constant 0 : index
    %c0_5 = arith.constant 0 : index
    %c0_6 = arith.constant 0 : index
    %2 = vector.load %arg5[%c0_3, %c0_4, %c0_5, %c0_6] : memref<1x8x4x128xf32, #tpu.memory_space<vmem>>, vector<1x1x4x128xf32>
    %3 = vector.shape_cast %2 : vector<1x1x4x128xf32> to vector<4x128xf32>
    %4 = vector.shape_cast %1 : vector<4x128xf32> to vector<1x1x4x128xf32>
    tpu.vector_store %arg5[%c0_3, %c0_4, %c0_5, %c0_6], %4 {strides = array<i32>} : memref<1x8x4x128xf32, #tpu.memory_space<vmem>>, vector<1x1x4x128xf32>,
    %c0_7 = arith.constant 0 : index
    %c0_8 = arith.constant 0 : index
    %c1 = arith.constant 1 : index
    %c0_9 = arith.constant 0 : index
    %5 = vector.load %arg4[%c0_7, %c0_8, %c1, %c0_9] : memref<1x4x8x128xf32, #tpu.memory_space<vmem>>, vector<1x4x1x128xf32>
    %6 = vector.shape_cast %5 : vector<1x4x1x128xf32> to vector<4x128xf32>
    %c0_10 = arith.constant 0 : index
    %c1_11 = arith.constant 1 : index
    %c0_12 = arith.constant 0 : index
    %c0_13 = arith.constant 0 : index
    %7 = vector.load %arg5[%c0_10, %c1_11, %c0_12, %c0_13] : memref<1x8x4x128xf32, #tpu.memory_space<vmem>>, vector<1x1x4x128xf32>
    %8 = vector.shape_cast %7 : vector<1x1x4x128xf32> to vector<4x128xf32>
    %9 = vector.shape_cast %6 : vector<4x128xf32> to vector<1x1x4x128xf32>
    tpu.vector_store %arg5[%c0_10, %c1_11, %c0_12, %c0_13], %9 {strides = array<i32>} : memref<1x8x4x128xf32, #tpu.memory_space<vmem>>, vector<1x1x4x128xf32>,
    %c0_14 = arith.constant 0 : index
    %c0_15 = arith.constant 0 : index
    %c2 = arith.constant 2 : index
    %c0_16 = arith.constant 0 : index
    %10 = vector.load %arg4[%c0_14, %c0_15, %c2, %c0_16] : memref<1x4x8x128xf32, #tpu.memory_space<vmem>>, vector<1x4x1x128xf32>
    %11 = vector.shape_cast %10 : vector<1x4x1x128xf32> to vector<4x128xf32>
    %c0_17 = arith.constant 0 : index
    %c2_18 = arith.constant 2 : index
    %c0_19 = arith.constant 0 : index
    %c0_20 = arith.constant 0 : index
    %12 = vector.load %arg5[%c0_17, %c2_18, %c0_19, %c0_20] : memref<1x8x4x128xf32, #tpu.memory_space<vmem>>, vector<1x1x4x128xf32>
    %13 = vector.shape_cast %12 : vector<1x1x4x128xf32> to vector<4x128xf32>
    %14 = vector.shape_cast %11 : vector<4x128xf32> to vector<1x1x4x128xf32>
    tpu.vector_store %arg5[%c0_17, %c2_18, %c0_19, %c0_20], %14 {strides = array<i32>} : memref<1x8x4x128xf32, #tpu.memory_space<vmem>>, vector<1x1x4x128xf32>,
    %c0_21 = arith.constant 0 : index
    %c0_22 = arith.constant 0 : index
    %c3 = arith.constant 3 : index
    %c0_23 = arith.constant 0 : index
    %15 = vector.load %arg4[%c0_21, %c0_22, %c3, %c0_23] : memref<1x4x8x128xf32, #tpu.memory_space<vmem>>, vector<1x4x1x128xf32>
    %16 = vector.shape_cast %15 : vector<1x4x1x128xf32> to vector<4x128xf32>
    %c0_24 = arith.constant 0 : index
    %c3_25 = arith.constant 3 : index
    %c0_26 = arith.constant 0 : index
    %c0_27 = arith.constant 0 : index
    %17 = vector.load %arg5[%c0_24, %c3_25, %c0_26, %c0_27] : memref<1x8x4x128xf32, #tpu.memory_space<vmem>>, vector<1x1x4x128xf32>
    %18 = vector.shape_cast %17 : vector<1x1x4x128xf32> to vector<4x128xf32>
    %19 = vector.shape_cast %16 : vector<4x128xf32> to vector<1x1x4x128xf32>
    tpu.vector_store %arg5[%c0_24, %c3_25, %c0_26, %c0_27], %19 {strides = array<i32>} : memref<1x8x4x128xf32, #tpu.memory_space<vmem>>, vector<1x1x4x128xf32>,
    %c0_28 = arith.constant 0 : index
    %c0_29 = arith.constant 0 : index
    %c4 = arith.constant 4 : index
    %c0_30 = arith.constant 0 : index
    %20 = vector.load %arg4[%c0_28, %c0_29, %c4, %c0_30] : memref<1x4x8x128xf32, #tpu.memory_space<vmem>>, vector<1x4x1x128xf32>
    %21 = vector.shape_cast %20 : vector<1x4x1x128xf32> to vector<4x128xf32>
    %c0_31 = arith.constant 0 : index
    %c4_32 = arith.constant 4 : index
    %c0_33 = arith.constant 0 : index
    %c0_34 = arith.constant 0 : index
    %22 = vector.load %arg5[%c0_31, %c4_32, %c0_33, %c0_34] : memref<1x8x4x128xf32, #tpu.memory_space<vmem>>, vector<1x1x4x128xf32>
    %23 = vector.shape_cast %22 : vector<1x1x4x128xf32> to vector<4x128xf32>
    %24 = vector.shape_cast %21 : vector<4x128xf32> to vector<1x1x4x128xf32>
    tpu.vector_store %arg5[%c0_31, %c4_32, %c0_33, %c0_34], %24 {strides = array<i32>} : memref<1x8x4x128xf32, #tpu.memory_space<vmem>>, vector<1x1x4x128xf32>,
    %c0_35 = arith.constant 0 : index
    %c0_36 = arith.constant 0 : index
    %c5 = arith.constant 5 : index
    %c0_37 = arith.constant 0 : index
    %25 = vector.load %arg4[%c0_35, %c0_36, %c5, %c0_37] : memref<1x4x8x128xf32, #tpu.memory_space<vmem>>, vector<1x4x1x128xf32>
    %26 = vector.shape_cast %25 : vector<1x4x1x128xf32> to vector<4x128xf32>
    %c0_38 = arith.constant 0 : index
    %c5_39 = arith.constant 5 : index
    %c0_40 = arith.constant 0 : index
    %c0_41 = arith.constant 0 : index
    %27 = vector.load %arg5[%c0_38, %c5_39, %c0_40, %c0_41] : memref<1x8x4x128xf32, #tpu.memory_space<vmem>>, vector<1x1x4x128xf32>
    %28 = vector.shape_cast %27 : vector<1x1x4x128xf32> to vector<4x128xf32>
    %29 = vector.shape_cast %26 : vector<4x128xf32> to vector<1x1x4x128xf32>
    tpu.vector_store %arg5[%c0_38, %c5_39, %c0_40, %c0_41], %29 {strides = array<i32>} : memref<1x8x4x128xf32, #tpu.memory_space<vmem>>, vector<1x1x4x128xf32>,
    %c0_42 = arith.constant 0 : index
    %c0_43 = arith.constant 0 : index
    %c6 = arith.constant 6 : index
    %c0_44 = arith.constant 0 : index
    %30 = vector.load %arg4[%c0_42, %c0_43, %c6, %c0_44] : memref<1x4x8x128xf32, #tpu.memory_space<vmem>>, vector<1x4x1x128xf32>
    %31 = vector.shape_cast %30 : vector<1x4x1x128xf32> to vector<4x128xf32>
    %c0_45 = arith.constant 0 : index
    %c6_46 = arith.constant 6 : index
    %c0_47 = arith.constant 0 : index
    %c0_48 = arith.constant 0 : index
    %32 = vector.load %arg5[%c0_45, %c6_46, %c0_47, %c0_48] : memref<1x8x4x128xf32, #tpu.memory_space<vmem>>, vector<1x1x4x128xf32>
    %33 = vector.shape_cast %32 : vector<1x1x4x128xf32> to vector<4x128xf32>
    %34 = vector.shape_cast %31 : vector<4x128xf32> to vector<1x1x4x128xf32>
    tpu.vector_store %arg5[%c0_45, %c6_46, %c0_47, %c0_48], %34 {strides = array<i32>} : memref<1x8x4x128xf32, #tpu.memory_space<vmem>>, vector<1x1x4x128xf32>,
    %c0_49 = arith.constant 0 : index
    %c0_50 = arith.constant 0 : index
    %c7 = arith.constant 7 : index
    %c0_51 = arith.constant 0 : index
    %35 = vector.load %arg4[%c0_49, %c0_50, %c7, %c0_51] : memref<1x4x8x128xf32, #tpu.memory_space<vmem>>, vector<1x4x1x128xf32>
    %36 = vector.shape_cast %35 : vector<1x4x1x128xf32> to vector<4x128xf32>
    %c0_52 = arith.constant 0 : index
    %c7_53 = arith.constant 7 : index
    %c0_54 = arith.constant 0 : index
    %c0_55 = arith.constant 0 : index
    %37 = vector.load %arg5[%c0_52, %c7_53, %c0_54, %c0_55] : memref<1x8x4x128xf32, #tpu.memory_space<vmem>>, vector<1x1x4x128xf32>
    %38 = vector.shape_cast %37 : vector<1x1x4x128xf32> to vector<4x128xf32>
    %39 = vector.shape_cast %36 : vector<4x128xf32> to vector<1x1x4x128xf32>
    tpu.vector_store %arg5[%c0_52, %c7_53, %c0_54, %c0_55], %39 {strides = array<i32>} : memref<1x8x4x128xf32, #tpu.memory_space<vmem>>, vector<1x1x4x128xf32>,
    return
  }
  func.func @transform_0(%arg0: i32, %arg1: i32, %arg2: i32, %arg3: i32) -> (i32, i32, i32, i32) {
    %c0_i32 = arith.constant 0 : i32
    return %arg0, %arg1, %arg2, %arg3 : i32, i32, i32, i32
  }
  func.func @transform_1(%arg0: i32, %arg1: i32, %arg2: i32, %arg3: i32) -> (i32, i32, i32, i32) {
    %c0_i32 = arith.constant 0 : i32
    return %arg0, %arg2, %arg1, %arg3 : i32, i32, i32, i32
  }
}

</mosaic_0001>

<llo_original>
// kernel: tpu_custom_call.1
$region0: #{tpu_custom_call.1}
  #allocation0 [shape = 'u32[]', space=smem, size = 0x4, offset = 0x4, fixed_abs, tag = 'smem constant byte address 0x4 - core index']
  #allocation1 [shape = 'u32[72,128]{1,0:T(1,128)}', space=vmem, size = 0x9000, scoped, tag = 'internal scratch']
  %s0 = inlined_call_operand.hbm [shape: f32[2,4,16,128], index: 0, kind: input, shape index: {}]
  %s1 = inlined_call_operand.hbm [shape: f32[2,16,4,128], index: 1, kind: output, shape index: {}]
  %s2 = sld [smem:[#allocation0]]
  $region41: #{tpu_custom_call.1} parent=0
    _
  %s4 = ssub.s32 1, %s2
  %s5 = scalar_select 0, %s4, %s2
  $region1: #{tpu_custom_call.1} parent=0
    #allocation2 [shape = 'u8[32768]{0}', space=vmem, size = 0x8000, scoped, tag = 'input window, operand 0']
    #allocation3 [shape = 's32[2]{0}', space=sflag, size = 0x8, scoped, tag = 'scoped memory for tpu_custom_call.1']
    #allocation4 [shape = 's32[2]{0}', space=sflag, size = 0x8, scoped, tag = 'scoped memory for tpu_custom_call.1']
    #allocation5 [shape = 'u8[32768]{0}', space=vmem, size = 0x8000, scoped, tag = 'output window, operand 0']
    %6 = vsyncpa [#allocation3], 0
    %s7 = scalar_lea.sflag [#allocation3], 1
    %8 = vsyncpa %s7, 0
    %9 = vsyncpa [#allocation4], 0
    %s10 = scalar_lea.sflag [#allocation4], 1
    %11 = vsyncpa %s10, 0
    loop: start=0, step=1, limit=6
    $region2: #{tpu_custom_call.1} parent=1 // loop_pre_header
      _
    $region3: #{tpu_custom_call.1} parent=1 // loop_header
      %s13 = sphi 0, %s17
      %p14 = scmp.ge.s32.totalorder %s13, 6
      %s20 = sphi 0, %s46
      %s21 = sphi 0, %s42
      %s22 = sphi 0, %s38
      %s23 = sphi 0, %s34
      %s24 = sphi 0, %s20
      %s25 = sphi 0, %s21
      %s26 = sphi 0, %s22
      %s27 = sphi 0, %s23
      %s28 = sphi 0, %s24
      %s29 = sphi 0, %s25
      %s30 = sphi 0, %s26
      %s31 = sphi 0, %s27
      %s55 = sphi 0, %s57
      %s58 = sphi 0, %s55
      %s59 = sphi 0, %s58
      %s75 = sphi 0, %s59
      %s87 = sphi 0, %s89
      %s90 = sphi 0, %s87
      %s91 = sphi 0, %s90
      %s107 = sphi 0, %s91
    $region4: #{tpu_custom_call.1} parent=1 // loop_header_branch
      %16 = sbr.rel (%p14) target = $region8
    $region5: #{tpu_custom_call.1} parent=1 // loop_body
      %s18 = ssub.s32 %s13, 1
      %s19 = ssub.s32 %s13, 2
      %s32 = sadd.s32 1, %s23
      %p33 = scmp.ge.s32.totalorder %s32, 1
      %s34 = scalar_select %p33, 0, %s32
      %s35 = sadd.s32 1, %s22
      %s36 = scalar_select %p33, %s35, %s22
      %p37 = scmp.ge.s32.totalorder %s36, 2
      %s38 = scalar_select %p37, 0, %s36
      %s39 = sadd.s32 1, %s21
      %s40 = scalar_select %p37, %s39, %s21
      %p41 = scmp.ge.s32.totalorder %s40, 1
      %s42 = scalar_select %p41, 0, %s40
      %s43 = sadd.s32 1, %s20
      %s44 = scalar_select %p41, %s43, %s20
      %p45 = scmp.ge.s32.totalorder %s44, 2
      %s46 = scalar_select %p45, 0, %s44
      %s47 = ssub.s32 %s20, %s46
      %s48 = ssub.s32 %s21, %s42
      %s49 = sor.u32 %s47, %s48
      %s50 = ssub.s32 %s22, %s38
      %s51 = sor.u32 %s49, %s50
      %s52 = ssub.s32 %s23, %s34
      %s53 = sor.u32 %s51, %s52
      %p54 = scmp.eq.s32.totalorder %s53, 0
      %s56 = sadd.s32 %s55, 1
      %s57 = scalar_select %p54, %s55, %s56
      %p60 = pneg %p54
      %p61 = scmp.eq.s32.totalorder %s13, 3
      %p62 = por %p60, %p61
      %p63 = scmp.ne.s32.totalorder %s55, %s58
      %p64 = scmp.eq.s32.totalorder %s13, 0
      %p65 = por %p63, %p64
      %p66 = scmp.ne.s32.totalorder %s55, %s58
      %p67 = scmp.eq.s32.totalorder %s18, 3
      %p68 = por %p66, %p67
      %p69 = scmp.ne.s32.totalorder %s58, %s59
      %p70 = scmp.eq.s32.totalorder %s18, 0
      %p71 = por %p69, %p70
      %p72 = scmp.ne.s32.totalorder %s58, %s59
      %p73 = scmp.eq.s32.totalorder %s19, 3
      %p74 = por %p72, %p73
      %p76 = scmp.ne.s32.totalorder %s59, %s75
      %p77 = scmp.eq.s32.totalorder %s19, 0
      %p78 = por %p76, %p77
      %s79 = ssub.s32 %s20, %s46
      %s80 = ssub.s32 %s22, %s38
      %s81 = sor.u32 %s79, %s80
      %s82 = ssub.s32 %s21, %s42
      %s83 = sor.u32 %s81, %s82
      %s84 = ssub.s32 %s23, %s34
      %s85 = sor.u32 %s83, %s84
      %p86 = scmp.eq.s32.totalorder %s85, 0
      %s88 = sadd.s32 %s87, 1
      %s89 = scalar_select %p86, %s87, %s88
      %p92 = pneg %p86
      %p93 = scmp.eq.s32.totalorder %s13, 3
      %p94 = por %p92, %p93
      %p95 = scmp.ne.s32.totalorder %s87, %s90
      %p96 = scmp.eq.s32.totalorder %s13, 0
      %p97 = por %p95, %p96
      %p98 = scmp.ne.s32.totalorder %s87, %s90
      %p99 = scmp.eq.s32.totalorder %s18, 3
      %p100 = por %p98, %p99
      %p101 = scmp.ne.s32.totalorder %s90, %s91
      %p102 = scmp.eq.s32.totalorder %s18, 0
      %p103 = por %p101, %p102
      %p104 = scmp.ne.s32.totalorder %s90, %s91
      %p105 = scmp.eq.s32.totalorder %s19, 3
      %p106 = por %p104, %p105
      %p108 = scmp.ne.s32.totalorder %s91, %s107
      %p109 = scmp.eq.s32.totalorder %s19, 0
      %p110 = por %p108, %p109
      %p111 = scmp.le.s32.totalorder 1, %s13
      %p112 = scmp.lt.s32.totalorder %s13, 5
      %p113 = pnand %p111, %p112
      %p114 = pneg %p113
      // Predicated region
      $region9: #{tpu_custom_call.1} parent=5 // pred_check
        _
      $region10: #{tpu_custom_call.1} parent=5 // pred_check_branch
        %116 = sbr.rel (%p113) target = $region12
      $region11: #{tpu_custom_call.1} parent=5 // pred_region
        %s117 = ssub.s32 %s13, 1
      $region12: #{tpu_custom_call.1} parent=5 // pred_fallthru
        _
      %p118 = scmp.lt.s32.totalorder %s13, 4
      // Predicated region
      $region13: #{tpu_custom_call.1} parent=5 // pred_check
        %p119 = pneg %p118
      $region14: #{tpu_custom_call.1} parent=5 // pred_check_branch
        %121 = sbr.rel (%p119) target = $region16
      $region15: #{tpu_custom_call.1} parent=5 // pred_region
        // Predicated region
        $region17: #{tpu_custom_call.1} parent=15 // pred_check
          %p122 = pneg %p65
        $region18: #{tpu_custom_call.1} parent=15 // pred_check_branch
          %124 = sbr.rel (%p122) target = $region20
        $region19: #{tpu_custom_call.1} parent=15 // pred_region
          %s125 = sand.u32 %s55, 1
          %s126 = scalar_lea.sflag [#allocation3], %s125
          %s127 = sand.u32 %s55, 1
          %s128 = smul.addr %s127, 32
          %s129 = scalar_lea.vmem [#allocation2], %s128
          %s130 = smul.u32 4, %s21
          %132 = vsyncadd %s126, 0
          %s133 = sadd.s32 %s23, %s22
          %s134 = smul.addr %s130, 2
          %s135 = sadd.s32 %s133, %s134
          %s136 = smul.addr %s20, 8
          %s137 = sadd.s32 %s135, %s136
          %s138 = smul.addr %s137, 8
          %s139 = scalar_lea.hbm %s0, %s138
          %s140 = sshll.u32 %s139, 4
          %s141 = int_to_ptr.hbm [resolvable:$true] %s140
          %s142 = sshll.u32 %s129, 4
          %s143 = int_to_ptr.vmem [resolvable:$true] %s142
          %148 = dma.hbm_to_vmem [thread:$0]  %s141, 512, %s143, %s126, 256, 128, 8
        $region20: #{tpu_custom_call.1} parent=15 // pred_fallthru
          _
      $region16: #{tpu_custom_call.1} parent=5 // pred_fallthru
        _
      %p149 = scmp.le.s32.totalorder 1, %s13
      %p150 = scmp.lt.s32.totalorder %s13, 5
      %p151 = pnand %p149, %p150
      %p152 = pneg %p151
      // Predicated region
      $region21: #{tpu_custom_call.1} parent=5 // pred_check
        _
      $region22: #{tpu_custom_call.1} parent=5 // pred_check_branch
        %154 = sbr.rel (%p151) target = $region24
      $region23: #{tpu_custom_call.1} parent=5 // pred_region
        %s155 = ssub.s32 %s13, 1
        %s156 = sand.u32 %s58, 1
        %s157 = scalar_lea.sflag [#allocation3], %s156
        %s158 = sand.u32 %s58, 1
        %s159 = smul.addr %s158, 32
        %s160 = scalar_lea.vmem [#allocation2], %s159
        // Predicated region
        $region25: #{tpu_custom_call.1} parent=23 // pred_check
          %p161 = pneg %p71
        $region26: #{tpu_custom_call.1} parent=23 // pred_check_branch
          %163 = sbr.rel (%p161) target = $region28
        $region27: #{tpu_custom_call.1} parent=23 // pred_region
          %165 = dma.done %s157, 512
        $region28: #{tpu_custom_call.1} parent=23 // pred_fallthru
          _
        %s166 = sand.u32 %s58, 1
        %s167 = scalar_lea.sflag [#allocation3], %s166
        %s168 = sand.u32 %s58, 1
        %s169 = smul.addr %s168, 32
        %s170 = scalar_lea.vmem [#allocation2], %s169
        %p171 = pneg %p71
        %p172 = pneg %p68
        %p173 = pneg %p103
        %p174 = pneg %p100
        %s175 = sand.u32 %s90, 1
        %s176 = scalar_lea.sflag [#allocation4], %s175
        %s177 = sand.u32 %s90, 1
        %s178 = smul.addr %s177, 32
        %s179 = scalar_lea.vmem [#allocation5], %s178
        %s180 = smul.u32 4, %s25
        %s181 = smul.u32 8, %s26
        %v182 = vld [vmem:[%s160] sm:$0x1]
        %v183 = vld [vmem:[%s160 + $0x8] sm:$0x1]
        %v184 = vld [vmem:[%s160 + $0x10] sm:$0x1]
        %v185 = vld [vmem:[%s160 + $0x18] sm:$0x1]
        %v190 = vrot.slane %v183, 7
        %vm191 = vcmask 1041409
        %v192 = vsel %vm191, %v190, %v182
        %v193 = vrot.slane %v184, 6
        %vm194 = vcmask 1042434
        %v195 = vsel %vm194, %v193, %v192
        %v196 = vrot.slane %v185, 5
        %vm197 = vcmask 1043459
        %v198 = vsel %vm197, %v196, %v195
        %200 = vst [vmem:[%s179] sm:$0xf] %v198
        %v201 = vld [vmem:[%s160 + $0x1] sm:$0x1]
        %v202 = vld [vmem:[%s160 + $0x9] sm:$0x1]
        %v203 = vld [vmem:[%s160 + $0x11] sm:$0x1]
        %v204 = vld [vmem:[%s160 + $0x19] sm:$0x1]
        %v209 = vrot.slane %v202, 7
        %v210 = vsel %vm191, %v209, %v201
        %v211 = vrot.slane %v203, 6
        %v212 = vsel %vm194, %v211, %v210
        %v213 = vrot.slane %v204, 5
        %v214 = vsel %vm197, %v213, %v212
        %s216 = scalar_lea.vmem %s179, 4 [#allocation5]
        %217 = vst [vmem:[%s216] sm:$0xf] %v214
        %v218 = vld [vmem:[%s160 + $0x2] sm:$0x1]
        %v219 = vld [vmem:[%s160 + $0xa] sm:$0x1]
        %v220 = vld [vmem:[%s160 + $0x12] sm:$0x1]
        %v221 = vld [vmem:[%s160 + $0x1a] sm:$0x1]
        %v226 = vrot.slane %v219, 7
        %v227 = vsel %vm191, %v226, %v218
        %v228 = vrot.slane %v220, 6
        %v229 = vsel %vm194, %v228, %v227
        %v230 = vrot.slane %v221, 5
        %v231 = vsel %vm197, %v230, %v229
        %s233 = scalar_lea.vmem %s179, 8 [#allocation5]
        %234 = vst [vmem:[%s233] sm:$0xf] %v231
        %v235 = vld [vmem:[%s160 + $0x3] sm:$0x1]
        %v236 = vld [vmem:[%s160 + $0xb] sm:$0x1]
        %v237 = vld [vmem:[%s160 + $0x13] sm:$0x1]
        %v238 = vld [vmem:[%s160 + $0x1b] sm:$0x1]
        %v243 = vrot.slane %v236, 7
        %v244 = vsel %vm191, %v243, %v235
        %v245 = vrot.slane %v237, 6
        %v246 = vsel %vm194, %v245, %v244
        %v247 = vrot.slane %v238, 5
        %v248 = vsel %vm197, %v247, %v246
        %s250 = scalar_lea.vmem %s179, 12 [#allocation5]
        %251 = vst [vmem:[%s250] sm:$0xf] %v248
        %v252 = vld [vmem:[%s160 + $0x4] sm:$0x1]
        %v253 = vld [vmem:[%s160 + $0xc] sm:$0x1]
        %v254 = vld [vmem:[%s160 + $0x14] sm:$0x1]
        %v255 = vld [vmem:[%s160 + $0x1c] sm:$0x1]
        %v260 = vrot.slane %v253, 7
        %v261 = vsel %vm191, %v260, %v252
        %v262 = vrot.slane %v254, 6
        %v263 = vsel %vm194, %v262, %v261
        %v264 = vrot.slane %v255, 5
        %v265 = vsel %vm197, %v264, %v263
        %s267 = scalar_lea.vmem %s179, 16 [#allocation5]
        %268 = vst [vmem:[%s267] sm:$0xf] %v265
        %v269 = vld [vmem:[%s160 + $0x5] sm:$0x1]
        %v270 = vld [vmem:[%s160 + $0xd] sm:$0x1]
        %v271 = vld [vmem:[%s160 + $0x15] sm:$0x1]
        %v272 = vld [vmem:[%s160 + $0x1d] sm:$0x1]
        %v277 = vrot.slane %v270, 7
        %v278 = vsel %vm191, %v277, %v269
        %v279 = vrot.slane %v271, 6
        %v280 = vsel %vm194, %v279, %v278
        %v281 = vrot.slane %v272, 5
        %v282 = vsel %vm197, %v281, %v280
        %s284 = scalar_lea.vmem %s179, 20 [#allocation5]
        %285 = vst [vmem:[%s284] sm:$0xf] %v282
        %v286 = vld [vmem:[%s160 + $0x6] sm:$0x1]
        %v287 = vld [vmem:[%s160 + $0xe] sm:$0x1]
        %v288 = vld [vmem:[%s160 + $0x16] sm:$0x1]
        %v289 = vld [vmem:[%s160 + $0x1e] sm:$0x1]
        %v294 = vrot.slane %v287, 7
        %v295 = vsel %vm191, %v294, %v286
        %v296 = vrot.slane %v288, 6
        %v297 = vsel %vm194, %v296, %v295
        %v298 = vrot.slane %v289, 5
        %v299 = vsel %vm197, %v298, %v297
        %s301 = scalar_lea.vmem %s179, 24 [#allocation5]
        %302 = vst [vmem:[%s301] sm:$0xf] %v299
        %v303 = vld [vmem:[%s160 + $0x7] sm:$0x1]
        %v304 = vld [vmem:[%s160 + $0xf] sm:$0x1]
        %v305 = vld [vmem:[%s160 + $0x17] sm:$0x1]
        %v306 = vld [vmem:[%s160 + $0x1f] sm:$0x1]
        %v311 = vrot.slane %v304, 7
        %v312 = vsel %vm191, %v311, %v303
        %v313 = vrot.slane %v305, 6
        %v314 = vsel %vm194, %v313, %v312
        %v315 = vrot.slane %v306, 5
        %v316 = vsel %vm197, %v315, %v314
        %s318 = scalar_lea.vmem %s179, 28 [#allocation5]
        %319 = vst [vmem:[%s318] sm:$0xf] %v316
        %s320 = sand.u32 %s90, 1
        %s321 = scalar_lea.sflag [#allocation4], %s320
        %s322 = sand.u32 %s90, 1
        %s323 = smul.addr %s322, 32
        %s324 = scalar_lea.vmem [#allocation5], %s323
        // Predicated region
        $region29: #{tpu_custom_call.1} parent=23 // pred_check
          %p325 = pneg %p100
        $region30: #{tpu_custom_call.1} parent=23 // pred_check_branch
          %327 = sbr.rel (%p325) target = $region32
        $region31: #{tpu_custom_call.1} parent=23 // pred_region
          %s328 = smul.u32 8, %s26
          %330 = vsyncadd %s321, 0
          %s331 = sadd.s32 %s27, %s25
          %s332 = sadd.s32 %s331, %s328
          %s333 = smul.addr %s24, 16
          %s334 = sadd.s32 %s332, %s333
          %s335 = smul.addr %s334, 4
          %s336 = scalar_lea.hbm %s1, %s335
          %s337 = sshll.u32 %s324, 4
          %s338 = int_to_ptr.vmem [resolvable:$true] %s337
          %s339 = sshll.u32 %s336, 4
          %s340 = int_to_ptr.hbm [resolvable:$true] %s339
          %345 = dma.vmem_to_hbm [thread:$0]  %s338, 512, %s340, %s321, 64, 64, 4
        $region32: #{tpu_custom_call.1} parent=23 // pred_fallthru
          _
      $region24: #{tpu_custom_call.1} parent=5 // pred_fallthru
        _
      %p346 = scmp.le.s32.totalorder 2, %s13
      // Predicated region
      $region33: #{tpu_custom_call.1} parent=5 // pred_check
        %p347 = pneg %p346
      $region34: #{tpu_custom_call.1} parent=5 // pred_check_branch
        %349 = sbr.rel (%p347) target = $region36
      $region35: #{tpu_custom_call.1} parent=5 // pred_region
        %s350 = ssub.s32 %s13, 2
        // Predicated region
        $region37: #{tpu_custom_call.1} parent=35 // pred_check
          %p351 = pneg %p106
        $region38: #{tpu_custom_call.1} parent=35 // pred_check_branch
          %353 = sbr.rel (%p351) target = $region40
        $region39: #{tpu_custom_call.1} parent=35 // pred_region
          %s354 = sand.u32 %s91, 1
          %s355 = scalar_lea.sflag [#allocation4], %s354
          %s356 = sand.u32 %s91, 1
          %s357 = smul.addr %s356, 32
          %s358 = scalar_lea.vmem [#allocation5], %s357
          %360 = dma.done %s355, 512
        $region40: #{tpu_custom_call.1} parent=35 // pred_fallthru
          _
      $region36: #{tpu_custom_call.1} parent=5 // pred_fallthru
        _
    $region6: #{tpu_custom_call.1} parent=1 // loop_footer
      %s17 = sadd.s32 1, %s13
    $region7: #{tpu_custom_call.1} parent=1 // loop_footer_branch
      %12 = sbr.rel target = $region3
    $region8: #{tpu_custom_call.1} parent=1 // loop_exit
      _
    %361 = vsyncpa [#allocation3], 1
    %s362 = scalar_lea.sflag [#allocation3], 1
    %363 = vsyncpa %s362, 1
    %364 = vsyncpa [#allocation4], 1
    %s365 = scalar_lea.sflag [#allocation4], 1
    %366 = vsyncpa %s365, 1

</llo_original>
